<compile_context>
chip_gen: v7x
topology: tpu7x:2x2x1
jax: 0.10.0
libtpu: 0.0.40
codegen_flags: <defaults>
</compile_context>

<pallas_src>
import jax
import jax.numpy as jnp
from jax import lax
from jax.experimental import pallas as pl
from jax.experimental.pallas import tpu as pltpu

INPUT_DIM = 28 * 28   # 784
HIDDEN_DIM = 128
OUTPUT_DIM = 10
OUT_PAD = 128         # pad 10 -> 128 output lanes for lane-dense stores


def _round_up(n, m):
    return ((n + m - 1) // m) * m


def _mlp_kernel(x_ref, w1_ref, b1_ref, w2_ref, b2_ref, o_ref):
    # One batch tile per grid step: x (TB,784) -> h (TB,128) -> y (TB,128 padded).
    x = x_ref[...]                                              # (TB, 784)

    # fc1: contract x's last axis against w1's last axis (w1 is (out=128, in=784)).
    h = lax.dot_general(
        x, w1_ref[...],
        dimension_numbers=(((1,), (1,)), ((), ())),
        preferred_element_type=jnp.float32)                     # (TB, 128)
    h = h + b1_ref[...]                                         # f32 bias add (VPU)
    h = jnp.maximum(h, 0.0)                                     # ReLU (VPU)

    # fc2: w2 padded to (128, 128) (out_pad, in) -> full MXU columns, dense store.
    y = lax.dot_general(
        h, w2_ref[...],
        dimension_numbers=(((1,), (1,)), ((), ())),
        preferred_element_type=jnp.float32)                     # (TB, 128)
    y = y + b2_ref[...]
    o_ref[...] = y.astype(o_ref.dtype)                          # unmasked 128-lane vst


def simple_model_forward(x, w1, b1, w2, b2, *, block_b=512):
    """Forward pass of SimpleModel.

    x  : (B, 1, 28, 28) or (B, 784) float32
    w1 : (HIDDEN_DIM, INPUT_DIM)  (native PyTorch Linear layout, NOT transposed)
    b1 : (HIDDEN_DIM,)
    w2 : (OUTPUT_DIM, HIDDEN_DIM)
    b2 : (OUTPUT_DIM,)
    returns (B, OUTPUT_DIM) float32
    """
    B = x.shape[0]
    x2d = x.reshape(B, -1).astype(jnp.float32)                  # torch.nn.Flatten
    assert x2d.shape[1] == INPUT_DIM

    # Weights stay in (out, in) layout — no transpose materialized in the wrapper.
    w1_f = jnp.asarray(w1, jnp.float32)                         # (128, 784)
    b1_r = jnp.asarray(b1, jnp.float32).reshape(1, HIDDEN_DIM)  # (1, 128)

    # Pad the 10-wide output path to 128 lanes (costs 64 KB VMEM, zero extra time).
    w2_pad = jnp.zeros((OUT_PAD, HIDDEN_DIM), jnp.float32)
    w2_pad = w2_pad.at[:OUTPUT_DIM].set(jnp.asarray(w2, jnp.float32))
    b2_pad = jnp.zeros((1, OUT_PAD), jnp.float32)
    b2_pad = b2_pad.at[0, :OUTPUT_DIM].set(jnp.asarray(b2, jnp.float32))

    # Batch tile: multiple of 8 sublanes (and of 128 at large B for v5e's MXU rows),
    # clamped to the (padded) batch for small inputs. 512 keeps VMEM well inside the
    # v7x 32 MiB scoped default (~3.2 MB double-buffered x + 0.4 MB w1 + 0.5 MB out).
    tb = min(block_b, _round_up(B, 8))
    tb = _round_up(tb, 8)
    b_pad = _round_up(B, tb)
    if b_pad != B:
        x2d = jnp.pad(x2d, ((0, b_pad - B), (0, 0)))

    out = pl.pallas_call(
        _mlp_kernel,
        out_shape=jax.ShapeDtypeStruct((b_pad, OUT_PAD), jnp.float32),
        grid_spec=pltpu.PrefetchScalarGridSpec(
            num_scalar_prefetch=0,
            grid=(b_pad // tb,),
            in_specs=[
                pl.BlockSpec((tb, INPUT_DIM), lambda i: (i, 0)),          # x tile
                pl.BlockSpec((HIDDEN_DIM, INPUT_DIM), lambda i: (0, 0)),  # w1 (resident)
                pl.BlockSpec((1, HIDDEN_DIM), lambda i: (0, 0)),          # b1
                pl.BlockSpec((OUT_PAD, HIDDEN_DIM), lambda i: (0, 0)),    # w2 padded
                pl.BlockSpec((1, OUT_PAD), lambda i: (0, 0)),             # b2 padded
            ],
            out_specs=pl.BlockSpec((tb, OUT_PAD), lambda i: (i, 0)),
        ),
        compiler_params=pltpu.CompilerParams(
            dimension_semantics=("parallel",)),   # megacore batch sharding on v7x
    )(x2d, w1_f, b1_r, w2_pad, b2_pad)

    return out[:B, :OUTPUT_DIM]


def init_params(key):
    """Deterministic parameter init (matches PyTorch Linear shapes)."""
    k1, k2, k3, k4 = jax.random.split(key, 4)
    lim1 = 1.0 / jnp.sqrt(INPUT_DIM)
    lim2 = 1.0 / jnp.sqrt(HIDDEN_DIM)
    w1 = jax.random.uniform(k1, (HIDDEN_DIM, INPUT_DIM), jnp.float32, -lim1, lim1)
    b1 = jax.random.uniform(k2, (HIDDEN_DIM,), jnp.float32, -lim1, lim1)
    w2 = jax.random.uniform(k3, (OUTPUT_DIM, HIDDEN_DIM), jnp.float32, -lim2, lim2)
    b2 = jax.random.uniform(k4, (OUTPUT_DIM,), jnp.float32, -lim2, lim2)
    return w1, b1, w2, b2


if __name__ == "__main__":
    key = jax.random.PRNGKey(0)
    k_x, k_p = jax.random.split(key)

    B = 8
    # NCHW MNIST-like input; Flatten handles (B, 1, 28, 28) -> (B, 784).
    x = jax.random.normal(k_x, (B, 1, 28, 28), jnp.float32)
    w1, b1, w2, b2 = init_params(k_p)

    out = simple_model_forward(x, w1, b1, w2, b2)
    out = jax.block_until_ready(out)

    # Cross-check against plain-JAX reference (pure f32 path -> tight tolerance).
    x2d = x.reshape(B, -1)
    ref = jnp.maximum(x2d @ w1.T + b1, 0.0) @ w2.T + b2
    assert out.shape == (B, OUTPUT_DIM)
    assert jnp.allclose(out, ref, atol=1e-5, rtol=1e-5)

    print("KERNEL_OK")
</pallas_src>

<mosaic_0001>
module attributes {stable_mosaic.version = 11 : i64} {
  func.func @_mlp_kernel(%arg0: i32, %arg1: memref<8x784xf32, #tpu.memory_space<vmem>>, %arg2: memref<128x784xf32, #tpu.memory_space<vmem>>, %arg3: memref<1x128xf32, #tpu.memory_space<vmem>>, %arg4: memref<128x128xf32, #tpu.memory_space<vmem>>, %arg5: memref<1x128xf32, #tpu.memory_space<vmem>>, %arg6: memref<8x128xf32, #tpu.memory_space<vmem>>) attributes {dimension_semantics = [#tpu.dimension_semantics<parallel>], iteration_bounds = array<i64: 1>, scalar_prefetch = 0 : i64, scratch_operands = 0 : i64, tpu.core_type = #tpu.core_type<tc>, window_params = [{transform_indices = @transform_0, window_bounds = array<i64: 8, 784>}, {pipeline_mode = #tpu.pipeline_mode<synchronous>, transform_indices = @transform_1, window_bounds = array<i64: 128, 784>}, {pipeline_mode = #tpu.pipeline_mode<synchronous>, transform_indices = @transform_2, window_bounds = array<i64: 1, 128>}, {pipeline_mode = #tpu.pipeline_mode<synchronous>, transform_indices = @transform_3, window_bounds = array<i64: 128, 128>}, {pipeline_mode = #tpu.pipeline_mode<synchronous>, transform_indices = @transform_4, window_bounds = array<i64: 1, 128>}, {transform_indices = @transform_5, window_bounds = array<i64: 8, 128>}]} {
    %c0 = arith.constant 0 : index
    %c0_0 = arith.constant 0 : index
    %0 = vector.load %arg1[%c0, %c0_0] : memref<8x784xf32, #tpu.memory_space<vmem>>, vector<8x784xf32>
    %c0_1 = arith.constant 0 : index
    %c0_2 = arith.constant 0 : index
    %1 = vector.load %arg2[%c0_1, %c0_2] : memref<128x784xf32, #tpu.memory_space<vmem>>, vector<128x784xf32>
    %cst = arith.constant dense<0.000000e+00> : vector<8x128xf32>
    %2 = tpu.matmul %0, %1, %cst {dimension_numbers = #tpu.dot_dimension_numbers<[1], [1], [0], [0], [0, 0, 1, 0], [], []>} : vector<8x784xf32>, vector<128x784xf32>, vector<8x128xf32> -> vector<8x128xf32>
    %c0_3 = arith.constant 0 : index
    %c0_4 = arith.constant 0 : index
    %3 = vector.load %arg3[%c0_3, %c0_4] : memref<1x128xf32, #tpu.memory_space<vmem>>, vector<1x128xf32>
    %4 = vector.broadcast %3 : vector<1x128xf32> to vector<8x128xf32>
    %5 = arith.addf %2, %4 : vector<8x128xf32>
    %cst_5 = arith.constant 0.000000e+00 : f32
    %6 = vector.broadcast %cst_5 : f32 to vector<8x128xf32>
    %7 = arith.maximumf %5, %6 : vector<8x128xf32>
    %c0_6 = arith.constant 0 : index
    %c0_7 = arith.constant 0 : index
    %8 = vector.load %arg4[%c0_6, %c0_7] : memref<128x128xf32, #tpu.memory_space<vmem>>, vector<128x128xf32>
    %cst_8 = arith.constant dense<0.000000e+00> : vector<8x128xf32>
    %9 = tpu.matmul %7, %8, %cst_8 {dimension_numbers = #tpu.dot_dimension_numbers<[1], [1], [0], [0], [0, 0, 1, 0], [], []>} : vector<8x128xf32>, vector<128x128xf32>, vector<8x128xf32> -> vector<8x128xf32>
    %c0_9 = arith.constant 0 : index
    %c0_10 = arith.constant 0 : index
    %10 = vector.load %arg5[%c0_9, %c0_10] : memref<1x128xf32, #tpu.memory_space<vmem>>, vector<1x128xf32>
    %11 = vector.broadcast %10 : vector<1x128xf32> to vector<8x128xf32>
    %12 = arith.addf %9, %11 : vector<8x128xf32>
    %c0_11 = arith.constant 0 : index
    %c0_12 = arith.constant 0 : index
    %13 = vector.load %arg6[%c0_11, %c0_12] : memref<8x128xf32, #tpu.memory_space<vmem>>, vector<8x128xf32>
    tpu.vector_store %arg6[%c0_11, %c0_12], %12 {strides = array<i32>} : memref<8x128xf32, #tpu.memory_space<vmem>>, vector<8x128xf32>,
    return
  }
  func.func @transform_0(%arg0: i32) -> (i32, i32) {
    %c0_i32 = arith.constant 0 : i32
    %c0_i32_0 = arith.constant 0 : i32
    return %arg0, %c0_i32 : i32, i32
  }
  func.func @transform_1(%arg0: i32) -> (i32, i32) {
    %c0_i32 = arith.constant 0 : i32
    %c0_i32_0 = arith.constant 0 : i32
    %c0_i32_1 = arith.constant 0 : i32
    return %c0_i32, %c0_i32_0 : i32, i32
  }
  func.func @transform_2(%arg0: i32) -> (i32, i32) {
    %c0_i32 = arith.constant 0 : i32
    %c0_i32_0 = arith.constant 0 : i32
    %c0_i32_1 = arith.constant 0 : i32
    return %c0_i32, %c0_i32_0 : i32, i32
  }
  func.func @transform_3(%arg0: i32) -> (i32, i32) {
    %c0_i32 = arith.constant 0 : i32
    %c0_i32_0 = arith.constant 0 : i32
    %c0_i32_1 = arith.constant 0 : i32
    return %c0_i32, %c0_i32_0 : i32, i32
  }
  func.func @transform_4(%arg0: i32) -> (i32, i32) {
    %c0_i32 = arith.constant 0 : i32
    %c0_i32_0 = arith.constant 0 : i32
    %c0_i32_1 = arith.constant 0 : i32
    return %c0_i32, %c0_i32_0 : i32, i32
  }
  func.func @transform_5(%arg0: i32) -> (i32, i32) {
    %c0_i32 = arith.constant 0 : i32
    %c0_i32_0 = arith.constant 0 : i32
    return %arg0, %c0_i32 : i32, i32
  }
}

</mosaic_0001>

<llo_original>
// kernel: tpu_custom_call.1
$region0: #{tpu_custom_call.1}
  #allocation0 [shape = 'u32[]', space=smem, size = 0x4, offset = 0x4, fixed_abs, tag = 'smem constant byte address 0x4 - core index']
  #allocation1 [shape = 'u32[144,128]{1,0:T(1,128)}', space=vmem, size = 0x12000, scoped, tag = 'internal scratch']
  %s0 = inlined_call_operand.vmem [shape: f32[8,784], index: 0, kind: input, shape index: {}]
  %s1 = inlined_call_operand.vmem [shape: f32[128,784], index: 1, kind: input, shape index: {}]
  %s2 = inlined_call_operand.vmem [shape: f32[1,128], index: 2, kind: input, shape index: {}]
  %s3 = inlined_call_operand.vmem [shape: f32[128,128], index: 3, kind: input, shape index: {}]
  %s4 = inlined_call_operand.vmem [shape: f32[1,128], index: 4, kind: input, shape index: {}]
  %s5 = inlined_call_operand.hbm [shape: f32[8,128], index: 5, kind: output, shape index: {}]
  %s6 = sld [smem:[#allocation0]]
  $region30: #{tpu_custom_call.1} parent=0
    _
  %s8 = ssub.s32 1, %s6
  %s9 = scalar_select 0, %s8, %s6
  $region1: #{tpu_custom_call.1} parent=0
    #allocation2 [shape = 'u8[4096]{0}', space=vmem, size = 0x1000, scoped, tag = 'output window, operand 0, single buffered']
    #allocation3 [shape = 's32[1]{0}', space=sflag, size = 0x4, scoped, tag = 'scoped memory for tpu_custom_call.1']
    %10 = vsyncpa [#allocation3], 0
    // Predicated region
    $region2: #{tpu_custom_call.1} parent=1 // pred_check
      _
    $region3: #{tpu_custom_call.1} parent=1 // pred_check_branch
      %12 = sbr.rel (0) target = $region5
    $region4: #{tpu_custom_call.1} parent=1 // pred_region
      _
    $region5: #{tpu_custom_call.1} parent=1 // pred_fallthru
      _
    // Predicated region
    $region6: #{tpu_custom_call.1} parent=1 // pred_check
      _
    $region7: #{tpu_custom_call.1} parent=1 // pred_check_branch
      %14 = sbr.rel (0) target = $region9
    $region8: #{tpu_custom_call.1} parent=1 // pred_region
      _
    $region9: #{tpu_custom_call.1} parent=1 // pred_fallthru
      _
    // Predicated region
    $region10: #{tpu_custom_call.1} parent=1 // pred_check
      _
    $region11: #{tpu_custom_call.1} parent=1 // pred_check_branch
      %16 = sbr.rel (0) target = $region13
    $region12: #{tpu_custom_call.1} parent=1 // pred_region
      _
    $region13: #{tpu_custom_call.1} parent=1 // pred_fallthru
      _
    // Predicated region
    $region14: #{tpu_custom_call.1} parent=1 // pred_check
      _
    $region15: #{tpu_custom_call.1} parent=1 // pred_check_branch
      %18 = sbr.rel (0) target = $region17
    $region16: #{tpu_custom_call.1} parent=1 // pred_region
      _
    $region17: #{tpu_custom_call.1} parent=1 // pred_fallthru
      _
    // Predicated region
    $region18: #{tpu_custom_call.1} parent=1 // pred_check
      _
    $region19: #{tpu_custom_call.1} parent=1 // pred_check_branch
      %20 = sbr.rel (0) target = $region21
    $region20: #{tpu_custom_call.1} parent=1 // pred_region
      _
    $region21: #{tpu_custom_call.1} parent=1 // pred_fallthru
      _
    %v21 = vld [vmem:[%s0] sm:$0xff]
    %v22 = vld [vmem:[%s0 + $0x8] sm:$0xff]
    %v23 = vld [vmem:[%s0 + $0x10] sm:$0xff]
    %v24 = vld [vmem:[%s0 + $0x18] sm:$0xff]
    %v25 = vld [vmem:[%s0 + $0x20] sm:$0xff]
    %v26 = vld [vmem:[%s0 + $0x28] sm:$0xff]
    %v27 = vld [vmem:[%s0 + $0x30] sm:$0xff]
    %v28 = vld [vmem:[%s1] sm:$0xff]
    %v29 = vld [vmem:[%s1 + $0x8] sm:$0xff]
    %v30 = vld [vmem:[%s1 + $0x10] sm:$0xff]
    %v31 = vld [vmem:[%s1 + $0x18] sm:$0xff]
    %v32 = vld [vmem:[%s1 + $0x20] sm:$0xff]
    %v33 = vld [vmem:[%s1 + $0x28] sm:$0xff]
    %v34 = vld [vmem:[%s1 + $0x30] sm:$0xff]
    %v35 = vld [vmem:[%s1 + $0x38] sm:$0xff]
    %v36 = vld [vmem:[%s1 + $0x40] sm:$0xff]
    %v37 = vld [vmem:[%s1 + $0x48] sm:$0xff]
    %v38 = vld [vmem:[%s1 + $0x50] sm:$0xff]
    %v39 = vld [vmem:[%s1 + $0x58] sm:$0xff]
    %v40 = vld [vmem:[%s1 + $0x60] sm:$0xff]
    %v41 = vld [vmem:[%s1 + $0x68] sm:$0xff]
    %v42 = vld [vmem:[%s1 + $0x70] sm:$0xff]
    %v43 = vld [vmem:[%s1 + $0x78] sm:$0xff]
    %v44 = vld [vmem:[%s1 + $0x80] sm:$0xff]
    %v45 = vld [vmem:[%s1 + $0x88] sm:$0xff]
    %v46 = vld [vmem:[%s1 + $0x90] sm:$0xff]
    %v47 = vld [vmem:[%s1 + $0x98] sm:$0xff]
    %v48 = vld [vmem:[%s1 + $0xa0] sm:$0xff]
    %v49 = vld [vmem:[%s1 + $0xa8] sm:$0xff]
    %v50 = vld [vmem:[%s1 + $0xb0] sm:$0xff]
    %v51 = vld [vmem:[%s1 + $0xb8] sm:$0xff]
    %v52 = vld [vmem:[%s1 + $0xc0] sm:$0xff]
    %v53 = vld [vmem:[%s1 + $0xc8] sm:$0xff]
    %v54 = vld [vmem:[%s1 + $0xd0] sm:$0xff]
    %v55 = vld [vmem:[%s1 + $0xd8] sm:$0xff]
    %v56 = vld [vmem:[%s1 + $0xe0] sm:$0xff]
    %v57 = vld [vmem:[%s1 + $0xe8] sm:$0xff]
    %v58 = vld [vmem:[%s1 + $0xf0] sm:$0xff]
    %v59 = vld [vmem:[%s1 + $0xf8] sm:$0xff]
    %v60 = vld [vmem:[%s1 + $0x100] sm:$0xff]
    %v61 = vld [vmem:[%s1 + $0x108] sm:$0xff]
    %v62 = vld [vmem:[%s1 + $0x110] sm:$0xff]
    %v63 = vld [vmem:[%s1 + $0x118] sm:$0xff]
    %v64 = vld [vmem:[%s1 + $0x120] sm:$0xff]
    %v65 = vld [vmem:[%s1 + $0x128] sm:$0xff]
    %v66 = vld [vmem:[%s1 + $0x130] sm:$0xff]
    %v67 = vld [vmem:[%s1 + $0x138] sm:$0xff]
    %v68 = vld [vmem:[%s1 + $0x140] sm:$0xff]
    %v69 = vld [vmem:[%s1 + $0x148] sm:$0xff]
    %v70 = vld [vmem:[%s1 + $0x150] sm:$0xff]
    %v71 = vld [vmem:[%s1 + $0x158] sm:$0xff]
    %v72 = vld [vmem:[%s1 + $0x160] sm:$0xff]
    %v73 = vld [vmem:[%s1 + $0x168] sm:$0xff]
    %v74 = vld [vmem:[%s1 + $0x170] sm:$0xff]
    %v75 = vld [vmem:[%s1 + $0x178] sm:$0xff]
    %v76 = vld [vmem:[%s1 + $0x180] sm:$0xff]
    %v77 = vld [vmem:[%s1 + $0x188] sm:$0xff]
    %v78 = vld [vmem:[%s1 + $0x190] sm:$0xff]
    %v79 = vld [vmem:[%s1 + $0x198] sm:$0xff]
    %v80 = vld [vmem:[%s1 + $0x1a0] sm:$0xff]
    %v81 = vld [vmem:[%s1 + $0x1a8] sm:$0xff]
    %v82 = vld [vmem:[%s1 + $0x1b0] sm:$0xff]
    %v83 = vld [vmem:[%s1 + $0x1b8] sm:$0xff]
    %v84 = vld [vmem:[%s1 + $0x1c0] sm:$0xff]
    %v85 = vld [vmem:[%s1 + $0x1c8] sm:$0xff]
    %v86 = vld [vmem:[%s1 + $0x1d0] sm:$0xff]
    %v87 = vld [vmem:[%s1 + $0x1d8] sm:$0xff]
    %v88 = vld [vmem:[%s1 + $0x1e0] sm:$0xff]
    %v89 = vld [vmem:[%s1 + $0x1e8] sm:$0xff]
    %v90 = vld [vmem:[%s1 + $0x1f0] sm:$0xff]
    %v91 = vld [vmem:[%s1 + $0x1f8] sm:$0xff]
    %v92 = vld [vmem:[%s1 + $0x200] sm:$0xff]
    %v93 = vld [vmem:[%s1 + $0x208] sm:$0xff]
    %v94 = vld [vmem:[%s1 + $0x210] sm:$0xff]
    %v95 = vld [vmem:[%s1 + $0x218] sm:$0xff]
    %v96 = vld [vmem:[%s1 + $0x220] sm:$0xff]
    %v97 = vld [vmem:[%s1 + $0x228] sm:$0xff]
    %v98 = vld [vmem:[%s1 + $0x230] sm:$0xff]
    %v99 = vld [vmem:[%s1 + $0x238] sm:$0xff]
    %v100 = vld [vmem:[%s1 + $0x240] sm:$0xff]
    %v101 = vld [vmem:[%s1 + $0x248] sm:$0xff]
    %v102 = vld [vmem:[%s1 + $0x250] sm:$0xff]
    %v103 = vld [vmem:[%s1 + $0x258] sm:$0xff]
    %v104 = vld [vmem:[%s1 + $0x260] sm:$0xff]
    %v105 = vld [vmem:[%s1 + $0x268] sm:$0xff]
    %v106 = vld [vmem:[%s1 + $0x270] sm:$0xff]
    %v107 = vld [vmem:[%s1 + $0x278] sm:$0xff]
    %v108 = vld [vmem:[%s1 + $0x280] sm:$0xff]
    %v109 = vld [vmem:[%s1 + $0x288] sm:$0xff]
    %v110 = vld [vmem:[%s1 + $0x290] sm:$0xff]
    %v111 = vld [vmem:[%s1 + $0x298] sm:$0xff]
    %v112 = vld [vmem:[%s1 + $0x2a0] sm:$0xff]
    %v113 = vld [vmem:[%s1 + $0x2a8] sm:$0xff]
    %v114 = vld [vmem:[%s1 + $0x2b0] sm:$0xff]
    %v115 = vld [vmem:[%s1 + $0x2b8] sm:$0xff]
    %v116 = vld [vmem:[%s1 + $0x2c0] sm:$0xff]
    %v117 = vld [vmem:[%s1 + $0x2c8] sm:$0xff]
    %v118 = vld [vmem:[%s1 + $0x2d0] sm:$0xff]
    %v119 = vld [vmem:[%s1 + $0x2d8] sm:$0xff]
    %v120 = vld [vmem:[%s1 + $0x2e0] sm:$0xff]
    %v121 = vld [vmem:[%s1 + $0x2e8] sm:$0xff]
    %v122 = vld [vmem:[%s1 + $0x2f0] sm:$0xff]
    %v123 = vld [vmem:[%s1 + $0x2f8] sm:$0xff]
    %v124 = vld [vmem:[%s1 + $0x300] sm:$0xff]
    %v125 = vld [vmem:[%s1 + $0x308] sm:$0xff]
    %v126 = vld [vmem:[%s1 + $0x310] sm:$0xff]
    %v127 = vld [vmem:[%s1 + $0x318] sm:$0xff]
    %v128 = vld [vmem:[%s1 + $0x320] sm:$0xff]
    %v129 = vld [vmem:[%s1 + $0x328] sm:$0xff]
    %v130 = vld [vmem:[%s1 + $0x330] sm:$0xff]
    %v131 = vld [vmem:[%s1 + $0x338] sm:$0xff]
    %v132 = vld [vmem:[%s1 + $0x340] sm:$0xff]
    %v133 = vld [vmem:[%s1 + $0x348] sm:$0xff]
    %v134 = vld [vmem:[%s1 + $0x350] sm:$0xff]
    %v135 = vld [vmem:[%s1 + $0x358] sm:$0xff]
    %v136 = vld [vmem:[%s1 + $0x360] sm:$0xff]
    %v137 = vld [vmem:[%s1 + $0x368] sm:$0xff]
    %v138 = vld [vmem:[%s1 + $0x370] sm:$0xff]
    %v139 = vld [vmem:[%s1 + $0x378] sm:$0xff]
    %v140 = vld [vmem:[%s2] sm:$0x1]
    %v142 = vlaneseq
    %v143 = vshrl.u32 %v142, 7
    %v144 = vsub.s32 0, %v143
    %v145 = vrot.slane %v140, %v144
    %vm147 = vcmask 130048
    %v149 = vsel %vm147, %v27, 0
    %v152 = vsel %vm147, %v34, 0
    %v155 = vsel %vm147, %v41, 0
    %v158 = vsel %vm147, %v48, 0
    %v161 = vsel %vm147, %v55, 0
    %v164 = vsel %vm147, %v62, 0
    %v167 = vsel %vm147, %v69, 0
    %v170 = vsel %vm147, %v76, 0
    %v173 = vsel %vm147, %v83, 0
    %v176 = vsel %vm147, %v90, 0
    %v179 = vsel %vm147, %v97, 0
    %v182 = vsel %vm147, %v104, 0
    %v185 = vsel %vm147, %v111, 0
    %v188 = vsel %vm147, %v118, 0
    %v191 = vsel %vm147, %v125, 0
    %v194 = vsel %vm147, %v132, 0
    %v197 = vsel %vm147, %v139, 0
    %199 = vmatprep.subr.mxu0 %v29
    %200 = vmatpush1.xpose.msra.mxu0 %v28
    %201 = vmatprep.subr.mxu0 %v36
    %202 = vmatpush1.xpose.msra.mxu0 %v35
    %203 = vmatprep.subr.mxu0 %v43
    %204 = vmatpush1.xpose.msra.mxu0 %v42
    %205 = vmatprep.subr.mxu0 %v50
    %206 = vmatpush1.xpose.msra.mxu0 %v49
    %207 = vmatprep.subr.mxu0 %v57
    %208 = vmatpush1.xpose.msra.mxu0 %v56
    %209 = vmatprep.subr.mxu0 %v64
    %210 = vmatpush1.xpose.msra.mxu0 %v63
    %211 = vmatprep.subr.mxu0 %v71
    %212 = vmatpush1.xpose.msra.mxu0 %v70
    %213 = vmatprep.subr.mxu0 %v78
    %214 = vmatpush1.xpose.msra.mxu0 %v77
    %215 = vmatprep.subr.mxu0 %v85
    %216 = vmatpush1.xpose.msra.mxu0 %v84
    %217 = vmatprep.subr.mxu0 %v92
    %218 = vmatpush1.xpose.msra.mxu0 %v91
    %219 = vmatprep.subr.mxu0 %v99
    %220 = vmatpush1.xpose.msra.mxu0 %v98
    %221 = vmatprep.subr.mxu0 %v106
    %222 = vmatpush1.xpose.msra.mxu0 %v105
    %223 = vmatprep.subr.mxu0 %v113
    %224 = vmatpush1.xpose.msra.mxu0 %v112
    %225 = vmatprep.subr.mxu0 %v120
    %226 = vmatpush1.xpose.msra.mxu0 %v119
    %227 = vmatprep.subr.mxu0 %v127
    %228 = vmatpush1.xpose.msra.mxu0 %v126
    %229 = vmatprep.subr.mxu0 %v134
    %230 = vmatpush1.xpose.msra.mxu0 %v133
    %231 = vmatprep.subr.mxu0 0.0
    %232 = vmatpush1.xpose.msra.mxu0 0.0
    %233 = vmatprep.subr.mxu0 0.0
    %234 = vmatpush1.xpose.msra.mxu0 0.0
    %235 = vmatprep.subr.mxu0 0.0
    %236 = vmatpush1.xpose.msra.mxu0 0.0
    %237 = vmatprep.subr.mxu0 0.0
    %238 = vmatpush1.xpose.msra.mxu0 0.0
    %239 = vmatprep.subr.mxu0 0.0
    %240 = vmatpush1.xpose.msra.mxu0 0.0
    %241 = vmatprep.subr.mxu0 0.0
    %242 = vmatpush1.xpose.msra.mxu0 0.0
    %243 = vmatprep.subr.mxu0 0.0
    %244 = vmatpush1.xpose.msra.mxu0 0.0
    %245 = vmatprep.subr.mxu0 0.0
    %246 = vmatpush1.xpose.msra.mxu0 0.0
    %247 = vmatprep.subr.mxu0 0.0
    %248 = vmatpush1.xpose.msra.mxu0 0.0
    %249 = vmatprep.subr.mxu0 0.0
    %250 = vmatpush1.xpose.msra.mxu0 0.0
    %251 = vmatprep.subr.mxu0 0.0
    %252 = vmatpush1.xpose.msra.mxu0 0.0
    %253 = vmatprep.subr.mxu0 0.0
    %254 = vmatpush1.xpose.msra.mxu0 0.0
    %255 = vmatprep.subr.mxu0 0.0
    %256 = vmatpush1.xpose.msra.mxu0 0.0
    %257 = vmatprep.subr.mxu0 0.0
    %258 = vmatpush1.xpose.msra.mxu0 0.0
    %259 = vmatprep.subr.mxu0 0.0
    %260 = vmatpush1.xpose.msra.mxu0 0.0
    %261 = vmatprep.subr.mxu0 0.0
    %262 = vmatpush1.xpose.msra.mxu0 0.0
    %263 = vmatprep.mubr.f32.mxu0 %v22
    %264 = vmatmul.mubr.f32.gmra.mrb[0].mxu0 %v21
    %v265 = vpop.f32.mrb[0].mxu0
    %v266 = vadd.f32 %v145, %v265
    %v267 = vpop.f32.mrb[0].mxu0
    %268 = vdwg.mxu0
    %269 = vmatprep.subr.mxu0 %v31
    %270 = vmatpush1.xpose.msra.mxu0 %v30
    %271 = vmatprep.subr.mxu0 %v38
    %272 = vmatpush1.xpose.msra.mxu0 %v37
    %273 = vmatprep.subr.mxu0 %v45
    %274 = vmatpush1.xpose.msra.mxu0 %v44
    %275 = vmatprep.subr.mxu0 %v52
    %276 = vmatpush1.xpose.msra.mxu0 %v51
    %277 = vmatprep.subr.mxu0 %v59
    %278 = vmatpush1.xpose.msra.mxu0 %v58
    %279 = vmatprep.subr.mxu0 %v66
    %280 = vmatpush1.xpose.msra.mxu0 %v65
    %281 = vmatprep.subr.mxu0 %v73
    %282 = vmatpush1.xpose.msra.mxu0 %v72
    %283 = vmatprep.subr.mxu0 %v80
    %284 = vmatpush1.xpose.msra.mxu0 %v79
    %285 = vmatprep.subr.mxu0 %v87
    %286 = vmatpush1.xpose.msra.mxu0 %v86
    %287 = vmatprep.subr.mxu0 %v94
    %288 = vmatpush1.xpose.msra.mxu0 %v93
    %289 = vmatprep.subr.mxu0 %v101
    %290 = vmatpush1.xpose.msra.mxu0 %v100
    %291 = vmatprep.subr.mxu0 %v108
    %292 = vmatpush1.xpose.msra.mxu0 %v107
    %293 = vmatprep.subr.mxu0 %v115
    %294 = vmatpush1.xpose.msra.mxu0 %v114
    %295 = vmatprep.subr.mxu0 %v122
    %296 = vmatpush1.xpose.msra.mxu0 %v121
    %297 = vmatprep.subr.mxu0 %v129
    %298 = vmatpush1.xpose.msra.mxu0 %v128
    %299 = vmatprep.subr.mxu0 %v136
    %300 = vmatpush1.xpose.msra.mxu0 %v135
    %301 = vmatprep.subr.mxu0 0.0
    %302 = vmatpush1.xpose.msra.mxu0 0.0
    %303 = vmatprep.subr.mxu0 0.0
    %304 = vmatpush1.xpose.msra.mxu0 0.0
    %305 = vmatprep.subr.mxu0 0.0
    %306 = vmatpush1.xpose.msra.mxu0 0.0
    %307 = vmatprep.subr.mxu0 0.0
    %308 = vmatpush1.xpose.msra.mxu0 0.0
    %309 = vmatprep.subr.mxu0 0.0
    %310 = vmatpush1.xpose.msra.mxu0 0.0
    %311 = vmatprep.subr.mxu0 0.0
    %312 = vmatpush1.xpose.msra.mxu0 0.0
    %313 = vmatprep.subr.mxu0 0.0
    %314 = vmatpush1.xpose.msra.mxu0 0.0
    %315 = vmatprep.subr.mxu0 0.0
    %316 = vmatpush1.xpose.msra.mxu0 0.0
    %317 = vmatprep.subr.mxu0 0.0
    %318 = vmatpush1.xpose.msra.mxu0 0.0
    %319 = vmatprep.subr.mxu0 0.0
    %320 = vmatpush1.xpose.msra.mxu0 0.0
    %321 = vmatprep.subr.mxu0 0.0
    %322 = vmatpush1.xpose.msra.mxu0 0.0
    %323 = vmatprep.subr.mxu0 0.0
    %324 = vmatpush1.xpose.msra.mxu0 0.0
    %325 = vmatprep.subr.mxu0 0.0
    %326 = vmatpush1.xpose.msra.mxu0 0.0
    %327 = vmatprep.subr.mxu0 0.0
    %328 = vmatpush1.xpose.msra.mxu0 0.0
    %329 = vmatprep.subr.mxu0 0.0
    %330 = vmatpush1.xpose.msra.mxu0 0.0
    %331 = vmatprep.subr.mxu0 0.0
    %332 = vmatpush1.xpose.msra.mxu0 0.0
    %333 = vmatprep.mubr.f32.mxu0 %v24
    %334 = vmatmul.mubr.f32.gmra.mrb[0].mxu0 %v23
    %v335 = vpop.f32.mrb[0].mxu0
    %v336 = vadd.f32 %v266, %v335
    %v337 = vpop.f32.mrb[0].mxu0
    %338 = vdwg.mxu0
    %339 = vmatprep.subr.mxu0 %v33
    %340 = vmatpush1.xpose.msra.mxu0 %v32
    %341 = vmatprep.subr.mxu0 %v40
    %342 = vmatpush1.xpose.msra.mxu0 %v39
    %343 = vmatprep.subr.mxu0 %v47
    %344 = vmatpush1.xpose.msra.mxu0 %v46
    %345 = vmatprep.subr.mxu0 %v54
    %346 = vmatpush1.xpose.msra.mxu0 %v53
    %347 = vmatprep.subr.mxu0 %v61
    %348 = vmatpush1.xpose.msra.mxu0 %v60
    %349 = vmatprep.subr.mxu0 %v68
    %350 = vmatpush1.xpose.msra.mxu0 %v67
    %351 = vmatprep.subr.mxu0 %v75
    %352 = vmatpush1.xpose.msra.mxu0 %v74
    %353 = vmatprep.subr.mxu0 %v82
    %354 = vmatpush1.xpose.msra.mxu0 %v81
    %355 = vmatprep.subr.mxu0 %v89
    %356 = vmatpush1.xpose.msra.mxu0 %v88
    %357 = vmatprep.subr.mxu0 %v96
    %358 = vmatpush1.xpose.msra.mxu0 %v95
    %359 = vmatprep.subr.mxu0 %v103
    %360 = vmatpush1.xpose.msra.mxu0 %v102
    %361 = vmatprep.subr.mxu0 %v110
    %362 = vmatpush1.xpose.msra.mxu0 %v109
    %363 = vmatprep.subr.mxu0 %v117
    %364 = vmatpush1.xpose.msra.mxu0 %v116
    %365 = vmatprep.subr.mxu0 %v124
    %366 = vmatpush1.xpose.msra.mxu0 %v123
    %367 = vmatprep.subr.mxu0 %v131
    %368 = vmatpush1.xpose.msra.mxu0 %v130
    %369 = vmatprep.subr.mxu0 %v138
    %370 = vmatpush1.xpose.msra.mxu0 %v137
    %371 = vmatprep.subr.mxu0 0.0
    %372 = vmatpush1.xpose.msra.mxu0 0.0
    %373 = vmatprep.subr.mxu0 0.0
    %374 = vmatpush1.xpose.msra.mxu0 0.0
    %375 = vmatprep.subr.mxu0 0.0
    %376 = vmatpush1.xpose.msra.mxu0 0.0
    %377 = vmatprep.subr.mxu0 0.0
    %378 = vmatpush1.xpose.msra.mxu0 0.0
    %379 = vmatprep.subr.mxu0 0.0
    %380 = vmatpush1.xpose.msra.mxu0 0.0
    %381 = vmatprep.subr.mxu0 0.0
    %382 = vmatpush1.xpose.msra.mxu0 0.0
    %383 = vmatprep.subr.mxu0 0.0
    %384 = vmatpush1.xpose.msra.mxu0 0.0
    %385 = vmatprep.subr.mxu0 0.0
    %386 = vmatpush1.xpose.msra.mxu0 0.0
    %387 = vmatprep.subr.mxu0 0.0
    %388 = vmatpush1.xpose.msra.mxu0 0.0
    %389 = vmatprep.subr.mxu0 0.0
    %390 = vmatpush1.xpose.msra.mxu0 0.0
    %391 = vmatprep.subr.mxu0 0.0
    %392 = vmatpush1.xpose.msra.mxu0 0.0
    %393 = vmatprep.subr.mxu0 0.0
    %394 = vmatpush1.xpose.msra.mxu0 0.0
    %395 = vmatprep.subr.mxu0 0.0
    %396 = vmatpush1.xpose.msra.mxu0 0.0
    %397 = vmatprep.subr.mxu0 0.0
    %398 = vmatpush1.xpose.msra.mxu0 0.0
    %399 = vmatprep.subr.mxu0 0.0
    %400 = vmatpush1.xpose.msra.mxu0 0.0
    %401 = vmatprep.subr.mxu0 0.0
    %402 = vmatpush1.xpose.msra.mxu0 0.0
    %403 = vmatprep.mubr.f32.mxu0 %v26
    %404 = vmatmul.mubr.f32.gmra.mrb[0].mxu0 %v25
    %v405 = vpop.f32.mrb[0].mxu0
    %v406 = vadd.f32 %v336, %v405
    %v407 = vpop.f32.mrb[0].mxu0
    %408 = vdwg.mxu0
    %409 = vmatprep.subr.mxu0 0.0
    %410 = vmatpush1.xpose.msra.mxu0 %v152
    %411 = vmatprep.subr.mxu0 0.0
    %412 = vmatpush1.xpose.msra.mxu0 %v155
    %413 = vmatprep.subr.mxu0 0.0
    %414 = vmatpush1.xpose.msra.mxu0 %v158
    %415 = vmatprep.subr.mxu0 0.0
    %416 = vmatpush1.xpose.msra.mxu0 %v161
    %417 = vmatprep.subr.mxu0 0.0
    %418 = vmatpush1.xpose.msra.mxu0 %v164
    %419 = vmatprep.subr.mxu0 0.0
    %420 = vmatpush1.xpose.msra.mxu0 %v167
    %421 = vmatprep.subr.mxu0 0.0
    %422 = vmatpush1.xpose.msra.mxu0 %v170
    %423 = vmatprep.subr.mxu0 0.0
    %424 = vmatpush1.xpose.msra.mxu0 %v173
    %425 = vmatprep.subr.mxu0 0.0
    %426 = vmatpush1.xpose.msra.mxu0 %v176
    %427 = vmatprep.subr.mxu0 0.0
    %428 = vmatpush1.xpose.msra.mxu0 %v179
    %429 = vmatprep.subr.mxu0 0.0
    %430 = vmatpush1.xpose.msra.mxu0 %v182
    %431 = vmatprep.subr.mxu0 0.0
    %432 = vmatpush1.xpose.msra.mxu0 %v185
    %433 = vmatprep.subr.mxu0 0.0
    %434 = vmatpush1.xpose.msra.mxu0 %v188
    %435 = vmatprep.subr.mxu0 0.0
    %436 = vmatpush1.xpose.msra.mxu0 %v191
    %437 = vmatprep.subr.mxu0 0.0
    %438 = vmatpush1.xpose.msra.mxu0 %v194
    %439 = vmatprep.subr.mxu0 0.0
    %440 = vmatpush1.xpose.msra.mxu0 %v197
    %441 = vmatprep.subr.mxu0 0.0
    %442 = vmatpush1.xpose.msra.mxu0 0.0
    %443 = vmatprep.subr.mxu0 0.0
    %444 = vmatpush1.xpose.msra.mxu0 0.0
    %445 = vmatprep.subr.mxu0 0.0
    %446 = vmatpush1.xpose.msra.mxu0 0.0
    %447 = vmatprep.subr.mxu0 0.0
    %448 = vmatpush1.xpose.msra.mxu0 0.0
    %449 = vmatprep.subr.mxu0 0.0
    %450 = vmatpush1.xpose.msra.mxu0 0.0
    %451 = vmatprep.subr.mxu0 0.0
    %452 = vmatpush1.xpose.msra.mxu0 0.0
    %453 = vmatprep.subr.mxu0 0.0
    %454 = vmatpush1.xpose.msra.mxu0 0.0
    %455 = vmatprep.subr.mxu0 0.0
    %456 = vmatpush1.xpose.msra.mxu0 0.0
    %457 = vmatprep.subr.mxu0 0.0
    %458 = vmatpush1.xpose.msra.mxu0 0.0
    %459 = vmatprep.subr.mxu0 0.0
    %460 = vmatpush1.xpose.msra.mxu0 0.0
    %461 = vmatprep.subr.mxu0 0.0
    %462 = vmatpush1.xpose.msra.mxu0 0.0
    %463 = vmatprep.subr.mxu0 0.0
    %464 = vmatpush1.xpose.msra.mxu0 0.0
    %465 = vmatprep.subr.mxu0 0.0
    %466 = vmatpush1.xpose.msra.mxu0 0.0
    %467 = vmatprep.subr.mxu0 0.0
    %468 = vmatpush1.xpose.msra.mxu0 0.0
    %469 = vmatprep.subr.mxu0 0.0
    %470 = vmatpush1.xpose.msra.mxu0 0.0
    %471 = vmatprep.subr.mxu0 0.0
    %472 = vmatpush1.xpose.msra.mxu0 0.0
    %473 = vmatprep.mubr.f32.mxu0 0.0
    %474 = vmatmul.mubr.f32.gmra.mrb[0].mxu0 %v149
    %v475 = vpop.f32.mrb[0].mxu0
    %v476 = vadd.f32 %v406, %v475
    %v477 = vpop.f32.mrb[0].mxu0
    %478 = vdwg.mxu0
    %v479 = vmax.f32 %v476, 0.0
    %v480 = vld [vmem:[%s3] sm:$0xff]
    %v481 = vld [vmem:[%s3 + $0x8] sm:$0xff]
    %v482 = vld [vmem:[%s3 + $0x10] sm:$0xff]
    %v483 = vld [vmem:[%s3 + $0x18] sm:$0xff]
    %v484 = vld [vmem:[%s3 + $0x20] sm:$0xff]
    %v485 = vld [vmem:[%s3 + $0x28] sm:$0xff]
    %v486 = vld [vmem:[%s3 + $0x30] sm:$0xff]
    %v487 = vld [vmem:[%s3 + $0x38] sm:$0xff]
    %v488 = vld [vmem:[%s3 + $0x40] sm:$0xff]
    %v489 = vld [vmem:[%s3 + $0x48] sm:$0xff]
    %v490 = vld [vmem:[%s3 + $0x50] sm:$0xff]
    %v491 = vld [vmem:[%s3 + $0x58] sm:$0xff]
    %v492 = vld [vmem:[%s3 + $0x60] sm:$0xff]
    %v493 = vld [vmem:[%s3 + $0x68] sm:$0xff]
    %v494 = vld [vmem:[%s3 + $0x70] sm:$0xff]
    %v495 = vld [vmem:[%s3 + $0x78] sm:$0xff]
    %v496 = vld [vmem:[%s4] sm:$0x1]
    %v498 = vlaneseq
    %v499 = vshrl.u32 %v498, 7
    %v500 = vsub.s32 0, %v499
    %v501 = vrot.slane %v496, %v500
    %503 = vmatprep.subr.mxu0 0.0
    %504 = vmatpush1.xpose.msra.mxu0 %v480
    %505 = vmatprep.subr.mxu0 0.0
    %506 = vmatpush1.xpose.msra.mxu0 %v481
    %507 = vmatprep.subr.mxu0 0.0
    %508 = vmatpush1.xpose.msra.mxu0 %v482
    %509 = vmatprep.subr.mxu0 0.0
    %510 = vmatpush1.xpose.msra.mxu0 %v483
    %511 = vmatprep.subr.mxu0 0.0
    %512 = vmatpush1.xpose.msra.mxu0 %v484
    %513 = vmatprep.subr.mxu0 0.0
    %514 = vmatpush1.xpose.msra.mxu0 %v485
    %515 = vmatprep.subr.mxu0 0.0
    %516 = vmatpush1.xpose.msra.mxu0 %v486
    %517 = vmatprep.subr.mxu0 0.0
    %518 = vmatpush1.xpose.msra.mxu0 %v487
    %519 = vmatprep.subr.mxu0 0.0
    %520 = vmatpush1.xpose.msra.mxu0 %v488
    %521 = vmatprep.subr.mxu0 0.0
    %522 = vmatpush1.xpose.msra.mxu0 %v489
    %523 = vmatprep.subr.mxu0 0.0
    %524 = vmatpush1.xpose.msra.mxu0 %v490
    %525 = vmatprep.subr.mxu0 0.0
    %526 = vmatpush1.xpose.msra.mxu0 %v491
    %527 = vmatprep.subr.mxu0 0.0
    %528 = vmatpush1.xpose.msra.mxu0 %v492
    %529 = vmatprep.subr.mxu0 0.0
    %530 = vmatpush1.xpose.msra.mxu0 %v493
    %531 = vmatprep.subr.mxu0 0.0
    %532 = vmatpush1.xpose.msra.mxu0 %v494
    %533 = vmatprep.subr.mxu0 0.0
    %534 = vmatpush1.xpose.msra.mxu0 %v495
    %535 = vmatprep.subr.mxu0 0.0
    %536 = vmatpush1.xpose.msra.mxu0 0.0
    %537 = vmatprep.subr.mxu0 0.0
    %538 = vmatpush1.xpose.msra.mxu0 0.0
    %539 = vmatprep.subr.mxu0 0.0
    %540 = vmatpush1.xpose.msra.mxu0 0.0
    %541 = vmatprep.subr.mxu0 0.0
    %542 = vmatpush1.xpose.msra.mxu0 0.0
    %543 = vmatprep.subr.mxu0 0.0
    %544 = vmatpush1.xpose.msra.mxu0 0.0
    %545 = vmatprep.subr.mxu0 0.0
    %546 = vmatpush1.xpose.msra.mxu0 0.0
    %547 = vmatprep.subr.mxu0 0.0
    %548 = vmatpush1.xpose.msra.mxu0 0.0
    %549 = vmatprep.subr.mxu0 0.0
    %550 = vmatpush1.xpose.msra.mxu0 0.0
    %551 = vmatprep.subr.mxu0 0.0
    %552 = vmatpush1.xpose.msra.mxu0 0.0
    %553 = vmatprep.subr.mxu0 0.0
    %554 = vmatpush1.xpose.msra.mxu0 0.0
    %555 = vmatprep.subr.mxu0 0.0
    %556 = vmatpush1.xpose.msra.mxu0 0.0
    %557 = vmatprep.subr.mxu0 0.0
    %558 = vmatpush1.xpose.msra.mxu0 0.0
    %559 = vmatprep.subr.mxu0 0.0
    %560 = vmatpush1.xpose.msra.mxu0 0.0
    %561 = vmatprep.subr.mxu0 0.0
    %562 = vmatpush1.xpose.msra.mxu0 0.0
    %563 = vmatprep.subr.mxu0 0.0
    %564 = vmatpush1.xpose.msra.mxu0 0.0
    %565 = vmatprep.subr.mxu0 0.0
    %566 = vmatpush1.xpose.msra.mxu0 0.0
    %567 = vmatprep.mubr.f32.mxu0 0.0
    %568 = vmatmul.mubr.f32.gmra.mrb[0].mxu0 %v479
    %v569 = vpop.f32.mrb[0].mxu0
    %v570 = vadd.f32 %v501, %v569
    %v571 = vpop.f32.mrb[0].mxu0
    %572 = vdwg.mxu0
    %573 = vst [vmem:[#allocation2] sm:$0xff] %v570
    // Predicated region
    $region22: #{tpu_custom_call.1} parent=1 // pred_check
      _
    $region23: #{tpu_custom_call.1} parent=1 // pred_check_branch
      %575 = sbr.rel (0) target = $region25
    $region24: #{tpu_custom_call.1} parent=1 // pred_region
      %s577 = ssub.s32 128, 128
      %578 = vsyncadd [#allocation3], %s577
      %s580 = sshll.u32 [#allocation2], 4
      %s581 = int_to_ptr.vmem [resolvable:$true] %s580
      %583 = dma.vmem_to_hbm [thread:$0]  %s581, 128, %s5, [#allocation3]
    $region25: #{tpu_custom_call.1} parent=1 // pred_fallthru
      _
    // Predicated region
    $region26: #{tpu_custom_call.1} parent=1 // pred_check
      _
    $region27: #{tpu_custom_call.1} parent=1 // pred_check_branch
      %585 = sbr.rel (0) target = $region29
    $region28: #{tpu_custom_call.1} parent=1 // pred_region
      %586 = dma.done [#allocation3], 128
    $region29: #{tpu_custom_call.1} parent=1 // pred_fallthru
      _
    %587 = vsyncpa [#allocation3], 1

</llo_original>
